<compile_context>
chip_gen: v6e
topology: v6e:2x2x1
jax: 0.10.0
libtpu: 0.0.40
codegen_flags: <defaults>
</compile_context>

<pallas_src>
import functools

import jax
import jax.numpy as jnp
from jax.experimental import pallas as pl
from jax.experimental.pallas import tpu as pltpu


def _round_up(x: int, m: int) -> int:
    return ((x + m - 1) // m) * m


def _fused_embedding_kernel(idx_ref, table_ref, out_ref, acc_ref, *, v_chunk):
    """One grid step: row tile (TN, F) x vocab chunk (VC, Dp).

    idx_ref:   (TN, F)  int32 — per-feature indices, already offset into the
                                concatenated vocabulary
    table_ref: (VC, Dp) f32   — vocab chunk of the block-diagonal fused table
    out_ref:   (TN, Dp) f32   — concatenated (lane-padded) embeddings
    acc_ref:   (TN, Dp) f32   — VMEM accumulator across vocab chunks
    """
    k = pl.program_id(1)

    @pl.when(k == 0)
    def _():
        acc_ref[...] = jnp.zeros_like(acc_ref)

    idx = idx_ref[...]                                   # (TN, F)
    tn, n_feat = idx.shape
    col = k * v_chunk + jax.lax.broadcasted_iota(jnp.int32, (tn, v_chunk), 1)

    # Multi-hot: exactly one 1 per (row, feature); feature vocab ranges are
    # disjoint, so OR across features is exact.  VPU compares feed one MXU
    # (TN, VC) @ (VC, Dp) matmul that writes the concatenated embedding rows.
    hot = idx[:, 0:1] == col
    for j in range(1, n_feat):
        hot = hot | (idx[:, j:j + 1] == col)

    acc_ref[...] += jnp.dot(
        hot.astype(table_ref.dtype), table_ref[...],
        preferred_element_type=jnp.float32)

    @pl.when(k == pl.num_programs(1) - 1)
    def _():
        out_ref[...] = acc_ref[...].astype(out_ref.dtype)


@functools.partial(jax.jit, static_argnames=("row_tile", "v_chunk"))
def _fused_lookup(idx_off, fused_table, *, row_tile, v_chunk):
    """idx_off: (N, F) int32 (vocab-offset); fused_table: (Vp, Dp) f32 -> (N, Dp)."""
    n, n_feat = idx_off.shape
    vp, dp = fused_table.shape
    n_pad = _round_up(n, row_tile)
    # Pad rows with an out-of-range sentinel so padded rows produce all-zeros.
    idx_p = jnp.pad(idx_off, ((0, n_pad - n), (0, 0)), constant_values=vp)

    grid = (n_pad // row_tile, vp // v_chunk)
    out = pl.pallas_call(
        functools.partial(_fused_embedding_kernel, v_chunk=v_chunk),
        out_shape=jax.ShapeDtypeStruct((n_pad, dp), fused_table.dtype),
        grid_spec=pltpu.PrefetchScalarGridSpec(
            num_scalar_prefetch=0,
            grid=grid,
            in_specs=[
                pl.BlockSpec((row_tile, n_feat), lambda i, k: (i, 0)),  # indices
                pl.BlockSpec((v_chunk, dp), lambda i, k: (k, 0)),       # table chunk
            ],
            out_specs=pl.BlockSpec((row_tile, dp), lambda i, k: (i, 0)),
            scratch_shapes=[pltpu.VMEM((row_tile, dp), jnp.float32)],
        ),
        compiler_params=pltpu.CompilerParams(
            dimension_semantics=("parallel", "arbitrary"),
        ),
    )(idx_p, fused_table)
    return out[:n]


def multi_embedding_forward(x, tables, *, row_tile=256, v_chunk_max=256):
    """JAX/Pallas equivalent of MultiEmbedding.forward.

    x:       dict feature -> int array of shape (B, S, 1)
    tables:  dict feature -> float32 array of shape (n + 1, dim)
    returns: (B, S, sum(dim)) float32, features concatenated in dict order.
    """
    features = list(x.keys())
    dims = [int(tables[f].shape[1]) for f in features]
    vocabs = [int(tables[f].shape[0]) for f in features]
    d_total = sum(dims)
    v_total = sum(vocabs)

    # Lane-dense padded fused dimensions.
    dp = _round_up(d_total, 128)
    vp = _round_up(v_total, 128)
    v_chunk = v_chunk_max if vp >= v_chunk_max else vp
    vp = _round_up(vp, v_chunk)

    # Block-diagonal fused table: feature f occupies rows [row_off, row_off+V_f)
    # and columns [col_off, col_off+D_f).  Padding rows/cols stay zero.
    fused_table = jnp.zeros((vp, dp), jnp.float32)
    row_offs = []
    ro = co = 0
    for f in features:
        row_offs.append(ro)
        vf, df = tables[f].shape
        fused_table = fused_table.at[ro:ro + vf, co:co + df].set(
            tables[f].astype(jnp.float32))
        ro += vf
        co += df

    # Per-feature indices (.int().squeeze(2)), offset into the fused vocab: (N, F).
    b, s = x[features[0]].shape[:2]
    idx_off = jnp.stack(
        [x[f].astype(jnp.int32)[:, :, 0].reshape(-1) + off
         for f, off in zip(features, row_offs)],
        axis=1,
    )

    out = _fused_lookup(idx_off, fused_table, row_tile=row_tile, v_chunk=v_chunk)
    return out[:, :d_total].reshape(b, s, d_total)


if __name__ == "__main__":
    # embedding_sizes: feature -> (num categorical classes, embedding dim)
    embedding_sizes = {
        "weekday": (7, 8),
        "month": (12, 4),
        "shop_id": (20, 16),
    }

    key = jax.random.PRNGKey(0)
    tables = {}
    x = {}
    batch, seq = 2, 8
    for feature, (n, dim) in embedding_sizes.items():
        key, k_w, k_x = jax.random.split(key, 3)
        # nn.Embedding default init: N(0, 1); table has n + 1 rows.
        tables[feature] = jax.random.normal(k_w, (n + 1, dim), dtype=jnp.float32)
        x[feature] = jax.random.randint(
            k_x, (batch, seq, 1), minval=0, maxval=n + 1, dtype=jnp.int32
        )

    out = multi_embedding_forward(x, tables)
    jax.block_until_ready(out)

    # Reference check against a plain-JAX gather + concat.
    ref = jnp.concatenate(
        [tables[f][x[f][:, :, 0]] for f in x.keys()], axis=2
    )
    assert out.shape == (batch, seq, sum(d for _, d in embedding_sizes.values()))
    assert jnp.allclose(out, ref, atol=1e-5), "mismatch vs reference gather"

    print("KERNEL_OK")
</pallas_src>

<mosaic_0001>
module attributes {stable_mosaic.version = 11 : i64} {
  func.func @_fused_embedding_kernel(%arg0: i32, %arg1: i32, %arg2: memref<256x3xi32, #tpu.memory_space<vmem>>, %arg3: memref<128x128xf32, #tpu.memory_space<vmem>>, %arg4: memref<256x128xf32, #tpu.memory_space<vmem>>, %arg5: memref<256x128xf32, #tpu.memory_space<vmem>>) attributes {dimension_semantics = [#tpu.dimension_semantics<parallel>, #tpu.dimension_semantics<arbitrary>], iteration_bounds = array<i64: 1, 1>, scalar_prefetch = 0 : i64, scratch_operands = 1 : i64, tpu.core_type = #tpu.core_type<tc>, window_params = [{transform_indices = @transform_0, window_bounds = array<i64: 256, 3>}, {transform_indices = @transform_1, window_bounds = array<i64: 128, 128>}, {transform_indices = @transform_2, window_bounds = array<i64: 256, 128>}]} {
    %c0_i32 = arith.constant 0 : i32
    %0 = arith.cmpi eq, %arg1, %c0_i32 : i32
    %1 = arith.extui %0 : i1 to i32
    %c0_i32_0 = arith.constant 0 : i32
    %2 = arith.cmpi ne, %1, %c0_i32_0 : i32
    scf.if %2 {
      %cst_10 = arith.constant 0.000000e+00 : f32
      %29 = vector.broadcast %cst_10 : f32 to vector<256x128xf32>
      %c0_11 = arith.constant 0 : index
      %c0_12 = arith.constant 0 : index
      %30 = vector.load %arg5[%c0_11, %c0_12] : memref<256x128xf32, #tpu.memory_space<vmem>>, vector<256x128xf32>
      tpu.vector_store %arg5[%c0_11, %c0_12], %29 {strides = array<i32>} : memref<256x128xf32, #tpu.memory_space<vmem>>, vector<256x128xf32>,
    } else {
    }
    %c0 = arith.constant 0 : index
    %c0_1 = arith.constant 0 : index
    %3 = vector.load %arg2[%c0, %c0_1] : memref<256x3xi32, #tpu.memory_space<vmem>>, vector<256x3xi32>
    %c128_i32 = arith.constant 128 : i32
    %4 = arith.muli %arg1, %c128_i32 : i32
    %5 = tpu.iota {dimensions = array<i32: 1>} : vector<256x128xi32>
    %6 = vector.broadcast %4 : i32 to vector<256x128xi32>
    %7 = arith.addi %6, %5 : vector<256x128xi32>
    %8 = vector.extract_strided_slice %3 {offsets = [0, 0], sizes = [256, 1], strides = [1, 1]} : vector<256x3xi32> to vector<256x1xi32>
    %9 = vector.broadcast %8 : vector<256x1xi32> to vector<256x128xi32>
    %10 = arith.cmpi eq, %9, %7 : vector<256x128xi32>
    %11 = vector.extract_strided_slice %3 {offsets = [0, 1], sizes = [256, 1], strides = [1, 1]} : vector<256x3xi32> to vector<256x1xi32>
    %12 = vector.broadcast %11 : vector<256x1xi32> to vector<256x128xi32>
    %13 = arith.cmpi eq, %12, %7 : vector<256x128xi32>
    %14 = arith.ori %10, %13 : vector<256x128xi1>
    %15 = vector.extract_strided_slice %3 {offsets = [0, 2], sizes = [256, 1], strides = [1, 1]} : vector<256x3xi32> to vector<256x1xi32>
    %16 = vector.broadcast %15 : vector<256x1xi32> to vector<256x128xi32>
    %17 = arith.cmpi eq, %16, %7 : vector<256x128xi32>
    %18 = arith.ori %14, %17 : vector<256x128xi1>
    %c0_2 = arith.constant 0 : index
    %c0_3 = arith.constant 0 : index
    %19 = vector.load %arg5[%c0_2, %c0_3] : memref<256x128xf32, #tpu.memory_space<vmem>>, vector<256x128xf32>
    %20 = arith.extui %18 : vector<256x128xi1> to vector<256x128xi32>
    %21 = arith.sitofp %20 : vector<256x128xi32> to vector<256x128xf32>
    %c0_4 = arith.constant 0 : index
    %c0_5 = arith.constant 0 : index
    %22 = vector.load %arg3[%c0_4, %c0_5] : memref<128x128xf32, #tpu.memory_space<vmem>>, vector<128x128xf32>
    %cst = arith.constant dense<0.000000e+00> : vector<256x128xf32>
    %23 = tpu.matmul %21, %22, %cst {dimension_numbers = #tpu.dot_dimension_numbers<[1], [0], [0], [1], [0, 0, 1, 1], [], []>} : vector<256x128xf32>, vector<128x128xf32>, vector<256x128xf32> -> vector<256x128xf32>
    %24 = arith.addf %19, %23 : vector<256x128xf32>
    %c0_6 = arith.constant 0 : index
    %c0_7 = arith.constant 0 : index
    %25 = vector.load %arg5[%c0_6, %c0_7] : memref<256x128xf32, #tpu.memory_space<vmem>>, vector<256x128xf32>
    tpu.vector_store %arg5[%c0_6, %c0_7], %24 {strides = array<i32>} : memref<256x128xf32, #tpu.memory_space<vmem>>, vector<256x128xf32>,
    %c0_i32_8 = arith.constant 0 : i32
    %26 = arith.cmpi eq, %arg1, %c0_i32_8 : i32
    %27 = arith.extui %26 : i1 to i32
    %c0_i32_9 = arith.constant 0 : i32
    %28 = arith.cmpi ne, %27, %c0_i32_9 : i32
    scf.if %28 {
      %c0_10 = arith.constant 0 : index
      %c0_11 = arith.constant 0 : index
      %29 = vector.load %arg5[%c0_10, %c0_11] : memref<256x128xf32, #tpu.memory_space<vmem>>, vector<256x128xf32>
      %c0_12 = arith.constant 0 : index
      %c0_13 = arith.constant 0 : index
      %30 = vector.load %arg4[%c0_12, %c0_13] : memref<256x128xf32, #tpu.memory_space<vmem>>, vector<256x128xf32>
      tpu.vector_store %arg4[%c0_12, %c0_13], %29 {strides = array<i32>} : memref<256x128xf32, #tpu.memory_space<vmem>>, vector<256x128xf32>,
    } else {
    }
    return
  }
  func.func @transform_0(%arg0: i32, %arg1: i32) -> (i32, i32) {
    %c0_i32 = arith.constant 0 : i32
    %c0_i32_0 = arith.constant 0 : i32
    return %arg0, %c0_i32 : i32, i32
  }
  func.func @transform_1(%arg0: i32, %arg1: i32) -> (i32, i32) {
    %c0_i32 = arith.constant 0 : i32
    %c0_i32_0 = arith.constant 0 : i32
    return %arg1, %c0_i32 : i32, i32
  }
  func.func @transform_2(%arg0: i32, %arg1: i32) -> (i32, i32) {
    %c0_i32 = arith.constant 0 : i32
    %c0_i32_0 = arith.constant 0 : i32
    return %arg0, %c0_i32 : i32, i32
  }
}

</mosaic_0001>

<llo_original>
// kernel: _fused_lookup.1
$region0: #{_fused_lookup.1}
  #allocation0 [shape = 'u32[]', space=smem, size = 0x4, offset = 0x4, fixed_abs, tag = 'smem constant byte address 0x4 - core index']
  #allocation1 [shape = 'u32[144,128]{1,0:T(1,128)}', space=vmem, size = 0x12000, scoped, tag = 'internal scratch']
  #allocation2 [shape = 'f32[256,128]{1,0:T(8,128)}', space=vmem, size = 0x20000, scoped, tag = 'scratch operand']
  %s0 = inlined_call_operand.vmem [shape: s32[256,3], index: 0, kind: input, shape index: {}]
  %s1 = inlined_call_operand.vmem [shape: f32[128,128], index: 1, kind: input, shape index: {}]
  %s2 = inlined_call_operand.vmem [shape: f32[256,128], index: 2, kind: output, shape index: {}]
  %s3 = sld [smem:[#allocation0]]
  $region26: #{_fused_lookup.1} parent=0
    _
  %s5 = ssub.s32 1, %s3
  %s6 = scalar_select 0, %s5, %s3
  // Predicated region
  $region2: #{_fused_lookup.1} parent=0 // pred_check
    _
  $region3: #{_fused_lookup.1} parent=0 // pred_check_branch
    %8 = sbr.rel (0) target = $region5
  $region4: #{_fused_lookup.1} parent=0 // pred_region
    _
  $region5: #{_fused_lookup.1} parent=0 // pred_fallthru
    _
  // Predicated region
  $region6: #{_fused_lookup.1} parent=0 // pred_check
    _
  $region7: #{_fused_lookup.1} parent=0 // pred_check_branch
    %10 = sbr.rel (0) target = $region9
  $region8: #{_fused_lookup.1} parent=0 // pred_region
    _
  $region9: #{_fused_lookup.1} parent=0 // pred_fallthru
    _
  %p11 = scmp.eq.s32.totalorder 0, 0
  // Predicated region
  $region10: #{_fused_lookup.1} parent=0 // pred_check
    %p12 = pneg %p11
  $region11: #{_fused_lookup.1} parent=0 // pred_check_branch
    %14 = sbr.rel (%p12) target = $region13
  $region12: #{_fused_lookup.1} parent=0 // pred_region
    %15 = vst [vmem:[#allocation2] sm:$0xff] 0.0
    %16 = vst [vmem:[#allocation2 + $0x8] sm:$0xff] 0.0
    %17 = vst [vmem:[#allocation2 + $0x10] sm:$0xff] 0.0
    %18 = vst [vmem:[#allocation2 + $0x18] sm:$0xff] 0.0
    %19 = vst [vmem:[#allocation2 + $0x20] sm:$0xff] 0.0
    %20 = vst [vmem:[#allocation2 + $0x28] sm:$0xff] 0.0
    %21 = vst [vmem:[#allocation2 + $0x30] sm:$0xff] 0.0
    %22 = vst [vmem:[#allocation2 + $0x38] sm:$0xff] 0.0
    %23 = vst [vmem:[#allocation2 + $0x40] sm:$0xff] 0.0
    %24 = vst [vmem:[#allocation2 + $0x48] sm:$0xff] 0.0
    %25 = vst [vmem:[#allocation2 + $0x50] sm:$0xff] 0.0
    %26 = vst [vmem:[#allocation2 + $0x58] sm:$0xff] 0.0
    %27 = vst [vmem:[#allocation2 + $0x60] sm:$0xff] 0.0
    %28 = vst [vmem:[#allocation2 + $0x68] sm:$0xff] 0.0
    %29 = vst [vmem:[#allocation2 + $0x70] sm:$0xff] 0.0
    %30 = vst [vmem:[#allocation2 + $0x78] sm:$0xff] 0.0
    %31 = vst [vmem:[#allocation2 + $0x80] sm:$0xff] 0.0
    %32 = vst [vmem:[#allocation2 + $0x88] sm:$0xff] 0.0
    %33 = vst [vmem:[#allocation2 + $0x90] sm:$0xff] 0.0
    %34 = vst [vmem:[#allocation2 + $0x98] sm:$0xff] 0.0
    %35 = vst [vmem:[#allocation2 + $0xa0] sm:$0xff] 0.0
    %36 = vst [vmem:[#allocation2 + $0xa8] sm:$0xff] 0.0
    %37 = vst [vmem:[#allocation2 + $0xb0] sm:$0xff] 0.0
    %38 = vst [vmem:[#allocation2 + $0xb8] sm:$0xff] 0.0
    %39 = vst [vmem:[#allocation2 + $0xc0] sm:$0xff] 0.0
    %40 = vst [vmem:[#allocation2 + $0xc8] sm:$0xff] 0.0
    %41 = vst [vmem:[#allocation2 + $0xd0] sm:$0xff] 0.0
    %42 = vst [vmem:[#allocation2 + $0xd8] sm:$0xff] 0.0
    %43 = vst [vmem:[#allocation2 + $0xe0] sm:$0xff] 0.0
    %44 = vst [vmem:[#allocation2 + $0xe8] sm:$0xff] 0.0
    %45 = vst [vmem:[#allocation2 + $0xf0] sm:$0xff] 0.0
    %46 = vst [vmem:[#allocation2 + $0xf8] sm:$0xff] 0.0
  $region13: #{_fused_lookup.1} parent=0 // pred_fallthru
    _
  %v47 = vld [vmem:[%s0] sm:$0xff]
  %v48 = vld [vmem:[%s0 + $0x8] sm:$0xff]
  %v49 = vld [vmem:[%s0 + $0x10] sm:$0xff]
  %v50 = vld [vmem:[%s0 + $0x18] sm:$0xff]
  %v51 = vld [vmem:[%s0 + $0x20] sm:$0xff]
  %v52 = vld [vmem:[%s0 + $0x28] sm:$0xff]
  %v53 = vld [vmem:[%s0 + $0x30] sm:$0xff]
  %v54 = vld [vmem:[%s0 + $0x38] sm:$0xff]
  %v55 = vld [vmem:[%s0 + $0x40] sm:$0xff]
  %v56 = vld [vmem:[%s0 + $0x48] sm:$0xff]
  %v57 = vld [vmem:[%s0 + $0x50] sm:$0xff]
  %v58 = vld [vmem:[%s0 + $0x58] sm:$0xff]
  %v59 = vld [vmem:[%s0 + $0x60] sm:$0xff]
  %v60 = vld [vmem:[%s0 + $0x68] sm:$0xff]
  %v61 = vld [vmem:[%s0 + $0x70] sm:$0xff]
  %v62 = vld [vmem:[%s0 + $0x78] sm:$0xff]
  %v63 = vld [vmem:[%s0 + $0x80] sm:$0xff]
  %v64 = vld [vmem:[%s0 + $0x88] sm:$0xff]
  %v65 = vld [vmem:[%s0 + $0x90] sm:$0xff]
  %v66 = vld [vmem:[%s0 + $0x98] sm:$0xff]
  %v67 = vld [vmem:[%s0 + $0xa0] sm:$0xff]
  %v68 = vld [vmem:[%s0 + $0xa8] sm:$0xff]
  %v69 = vld [vmem:[%s0 + $0xb0] sm:$0xff]
  %v70 = vld [vmem:[%s0 + $0xb8] sm:$0xff]
  %v71 = vld [vmem:[%s0 + $0xc0] sm:$0xff]
  %v72 = vld [vmem:[%s0 + $0xc8] sm:$0xff]
  %v73 = vld [vmem:[%s0 + $0xd0] sm:$0xff]
  %v74 = vld [vmem:[%s0 + $0xd8] sm:$0xff]
  %v75 = vld [vmem:[%s0 + $0xe0] sm:$0xff]
  %v76 = vld [vmem:[%s0 + $0xe8] sm:$0xff]
  %v77 = vld [vmem:[%s0 + $0xf0] sm:$0xff]
  %v78 = vld [vmem:[%s0 + $0xf8] sm:$0xff]
  %s79 = smul.u32 0, 128
  %v80 = vlaneseq
  %v81 = vand.u32 %v80, 127
  %v82 = vstv %s79
  %v83 = vadd.s32 %v82, %v81
  %84 = vset.pattern.permute.xlu0 0
  %85 = vperm.xlu0 %84, %v47
  %v86 = vpop.permute.xlu0 %85
  %87 = vset.pattern.permute.xlu0 0
  %88 = vperm.xlu0 %87, %v48
  %v89 = vpop.permute.xlu0 %88
  %90 = vset.pattern.permute.xlu0 0
  %91 = vperm.xlu0 %90, %v49
  %v92 = vpop.permute.xlu0 %91
  %93 = vset.pattern.permute.xlu0 0
  %94 = vperm.xlu0 %93, %v50
  %v95 = vpop.permute.xlu0 %94
  %96 = vset.pattern.permute.xlu0 0
  %97 = vperm.xlu0 %96, %v51
  %v98 = vpop.permute.xlu0 %97
  %99 = vset.pattern.permute.xlu0 0
  %100 = vperm.xlu0 %99, %v52
  %v101 = vpop.permute.xlu0 %100
  %102 = vset.pattern.permute.xlu0 0
  %103 = vperm.xlu0 %102, %v53
  %v104 = vpop.permute.xlu0 %103
  %105 = vset.pattern.permute.xlu0 0
  %106 = vperm.xlu0 %105, %v54
  %v107 = vpop.permute.xlu0 %106
  %108 = vset.pattern.permute.xlu0 0
  %109 = vperm.xlu0 %108, %v55
  %v110 = vpop.permute.xlu0 %109
  %111 = vset.pattern.permute.xlu0 0
  %112 = vperm.xlu0 %111, %v56
  %v113 = vpop.permute.xlu0 %112
  %114 = vset.pattern.permute.xlu0 0
  %115 = vperm.xlu0 %114, %v57
  %v116 = vpop.permute.xlu0 %115
  %117 = vset.pattern.permute.xlu0 0
  %118 = vperm.xlu0 %117, %v58
  %v119 = vpop.permute.xlu0 %118
  %120 = vset.pattern.permute.xlu0 0
  %121 = vperm.xlu0 %120, %v59
  %v122 = vpop.permute.xlu0 %121
  %123 = vset.pattern.permute.xlu0 0
  %124 = vperm.xlu0 %123, %v60
  %v125 = vpop.permute.xlu0 %124
  %126 = vset.pattern.permute.xlu0 0
  %127 = vperm.xlu0 %126, %v61
  %v128 = vpop.permute.xlu0 %127
  %129 = vset.pattern.permute.xlu0 0
  %130 = vperm.xlu0 %129, %v62
  %v131 = vpop.permute.xlu0 %130
  %132 = vset.pattern.permute.xlu0 0
  %133 = vperm.xlu0 %132, %v63
  %v134 = vpop.permute.xlu0 %133
  %135 = vset.pattern.permute.xlu0 0
  %136 = vperm.xlu0 %135, %v64
  %v137 = vpop.permute.xlu0 %136
  %138 = vset.pattern.permute.xlu0 0
  %139 = vperm.xlu0 %138, %v65
  %v140 = vpop.permute.xlu0 %139
  %141 = vset.pattern.permute.xlu0 0
  %142 = vperm.xlu0 %141, %v66
  %v143 = vpop.permute.xlu0 %142
  %144 = vset.pattern.permute.xlu0 0
  %145 = vperm.xlu0 %144, %v67
  %v146 = vpop.permute.xlu0 %145
  %147 = vset.pattern.permute.xlu0 0
  %148 = vperm.xlu0 %147, %v68
  %v149 = vpop.permute.xlu0 %148
  %150 = vset.pattern.permute.xlu0 0
  %151 = vperm.xlu0 %150, %v69
  %v152 = vpop.permute.xlu0 %151
  %153 = vset.pattern.permute.xlu0 0
  %154 = vperm.xlu0 %153, %v70
  %v155 = vpop.permute.xlu0 %154
  %156 = vset.pattern.permute.xlu0 0
  %157 = vperm.xlu0 %156, %v71
  %v158 = vpop.permute.xlu0 %157
  %159 = vset.pattern.permute.xlu0 0
  %160 = vperm.xlu0 %159, %v72
  %v161 = vpop.permute.xlu0 %160
  %162 = vset.pattern.permute.xlu0 0
  %163 = vperm.xlu0 %162, %v73
  %v164 = vpop.permute.xlu0 %163
  %165 = vset.pattern.permute.xlu0 0
  %166 = vperm.xlu0 %165, %v74
  %v167 = vpop.permute.xlu0 %166
  %168 = vset.pattern.permute.xlu0 0
  %169 = vperm.xlu0 %168, %v75
  %v170 = vpop.permute.xlu0 %169
  %171 = vset.pattern.permute.xlu0 0
  %172 = vperm.xlu0 %171, %v76
  %v173 = vpop.permute.xlu0 %172
  %174 = vset.pattern.permute.xlu0 0
  %175 = vperm.xlu0 %174, %v77
  %v176 = vpop.permute.xlu0 %175
  %177 = vset.pattern.permute.xlu0 0
  %178 = vperm.xlu0 %177, %v78
  %v179 = vpop.permute.xlu0 %178
  %vm180 = vcmp.eq.s32.totalorder %v86, %v83
  %vm181 = vcmp.eq.s32.totalorder %v89, %v83
  %vm182 = vcmp.eq.s32.totalorder %v92, %v83
  %vm183 = vcmp.eq.s32.totalorder %v95, %v83
  %vm184 = vcmp.eq.s32.totalorder %v98, %v83
  %vm185 = vcmp.eq.s32.totalorder %v101, %v83
  %vm186 = vcmp.eq.s32.totalorder %v104, %v83
  %vm187 = vcmp.eq.s32.totalorder %v107, %v83
  %vm188 = vcmp.eq.s32.totalorder %v110, %v83
  %vm189 = vcmp.eq.s32.totalorder %v113, %v83
  %vm190 = vcmp.eq.s32.totalorder %v116, %v83
  %vm191 = vcmp.eq.s32.totalorder %v119, %v83
  %vm192 = vcmp.eq.s32.totalorder %v122, %v83
  %vm193 = vcmp.eq.s32.totalorder %v125, %v83
  %vm194 = vcmp.eq.s32.totalorder %v128, %v83
  %vm195 = vcmp.eq.s32.totalorder %v131, %v83
  %vm196 = vcmp.eq.s32.totalorder %v134, %v83
  %vm197 = vcmp.eq.s32.totalorder %v137, %v83
  %vm198 = vcmp.eq.s32.totalorder %v140, %v83
  %vm199 = vcmp.eq.s32.totalorder %v143, %v83
  %vm200 = vcmp.eq.s32.totalorder %v146, %v83
  %vm201 = vcmp.eq.s32.totalorder %v149, %v83
  %vm202 = vcmp.eq.s32.totalorder %v152, %v83
  %vm203 = vcmp.eq.s32.totalorder %v155, %v83
  %vm204 = vcmp.eq.s32.totalorder %v158, %v83
  %vm205 = vcmp.eq.s32.totalorder %v161, %v83
  %vm206 = vcmp.eq.s32.totalorder %v164, %v83
  %vm207 = vcmp.eq.s32.totalorder %v167, %v83
  %vm208 = vcmp.eq.s32.totalorder %v170, %v83
  %vm209 = vcmp.eq.s32.totalorder %v173, %v83
  %vm210 = vcmp.eq.s32.totalorder %v176, %v83
  %vm211 = vcmp.eq.s32.totalorder %v179, %v83
  %212 = vset.pattern.permute.xlu0 1
  %213 = vperm.xlu0 %212, %v47
  %v214 = vpop.permute.xlu0 %213
  %215 = vset.pattern.permute.xlu0 1
  %216 = vperm.xlu0 %215, %v48
  %v217 = vpop.permute.xlu0 %216
  %218 = vset.pattern.permute.xlu0 1
  %219 = vperm.xlu0 %218, %v49
  %v220 = vpop.permute.xlu0 %219
  %221 = vset.pattern.permute.xlu0 1
  %222 = vperm.xlu0 %221, %v50
  %v223 = vpop.permute.xlu0 %222
  %224 = vset.pattern.permute.xlu0 1
  %225 = vperm.xlu0 %224, %v51
  %v226 = vpop.permute.xlu0 %225
  %227 = vset.pattern.permute.xlu0 1
  %228 = vperm.xlu0 %227, %v52
  %v229 = vpop.permute.xlu0 %228
  %230 = vset.pattern.permute.xlu0 1
  %231 = vperm.xlu0 %230, %v53
  %v232 = vpop.permute.xlu0 %231
  %233 = vset.pattern.permute.xlu0 1
  %234 = vperm.xlu0 %233, %v54
  %v235 = vpop.permute.xlu0 %234
  %236 = vset.pattern.permute.xlu0 1
  %237 = vperm.xlu0 %236, %v55
  %v238 = vpop.permute.xlu0 %237
  %239 = vset.pattern.permute.xlu0 1
  %240 = vperm.xlu0 %239, %v56
  %v241 = vpop.permute.xlu0 %240
  %242 = vset.pattern.permute.xlu0 1
  %243 = vperm.xlu0 %242, %v57
  %v244 = vpop.permute.xlu0 %243
  %245 = vset.pattern.permute.xlu0 1
  %246 = vperm.xlu0 %245, %v58
  %v247 = vpop.permute.xlu0 %246
  %248 = vset.pattern.permute.xlu0 1
  %249 = vperm.xlu0 %248, %v59
  %v250 = vpop.permute.xlu0 %249
  %251 = vset.pattern.permute.xlu0 1
  %252 = vperm.xlu0 %251, %v60
  %v253 = vpop.permute.xlu0 %252
  %254 = vset.pattern.permute.xlu0 1
  %255 = vperm.xlu0 %254, %v61
  %v256 = vpop.permute.xlu0 %255
  %257 = vset.pattern.permute.xlu0 1
  %258 = vperm.xlu0 %257, %v62
  %v259 = vpop.permute.xlu0 %258
  %260 = vset.pattern.permute.xlu0 1
  %261 = vperm.xlu0 %260, %v63
  %v262 = vpop.permute.xlu0 %261
  %263 = vset.pattern.permute.xlu0 1
  %264 = vperm.xlu0 %263, %v64
  %v265 = vpop.permute.xlu0 %264
  %266 = vset.pattern.permute.xlu0 1
  %267 = vperm.xlu0 %266, %v65
  %v268 = vpop.permute.xlu0 %267
  %269 = vset.pattern.permute.xlu0 1
  %270 = vperm.xlu0 %269, %v66
  %v271 = vpop.permute.xlu0 %270
  %272 = vset.pattern.permute.xlu0 1
  %273 = vperm.xlu0 %272, %v67
  %v274 = vpop.permute.xlu0 %273
  %275 = vset.pattern.permute.xlu0 1
  %276 = vperm.xlu0 %275, %v68
  %v277 = vpop.permute.xlu0 %276
  %278 = vset.pattern.permute.xlu0 1
  %279 = vperm.xlu0 %278, %v69
  %v280 = vpop.permute.xlu0 %279
  %281 = vset.pattern.permute.xlu0 1
  %282 = vperm.xlu0 %281, %v70
  %v283 = vpop.permute.xlu0 %282
  %284 = vset.pattern.permute.xlu0 1
  %285 = vperm.xlu0 %284, %v71
  %v286 = vpop.permute.xlu0 %285
  %287 = vset.pattern.permute.xlu0 1
  %288 = vperm.xlu0 %287, %v72
  %v289 = vpop.permute.xlu0 %288
  %290 = vset.pattern.permute.xlu0 1
  %291 = vperm.xlu0 %290, %v73
  %v292 = vpop.permute.xlu0 %291
  %293 = vset.pattern.permute.xlu0 1
  %294 = vperm.xlu0 %293, %v74
  %v295 = vpop.permute.xlu0 %294
  %296 = vset.pattern.permute.xlu0 1
  %297 = vperm.xlu0 %296, %v75
  %v298 = vpop.permute.xlu0 %297
  %299 = vset.pattern.permute.xlu0 1
  %300 = vperm.xlu0 %299, %v76
  %v301 = vpop.permute.xlu0 %300
  %302 = vset.pattern.permute.xlu0 1
  %303 = vperm.xlu0 %302, %v77
  %v304 = vpop.permute.xlu0 %303
  %305 = vset.pattern.permute.xlu0 1
  %306 = vperm.xlu0 %305, %v78
  %v307 = vpop.permute.xlu0 %306
  %vm308 = vcmp.eq.s32.totalorder %v214, %v83
  %vm309 = vcmp.eq.s32.totalorder %v217, %v83
  %vm310 = vcmp.eq.s32.totalorder %v220, %v83
  %vm311 = vcmp.eq.s32.totalorder %v223, %v83
  %vm312 = vcmp.eq.s32.totalorder %v226, %v83
  %vm313 = vcmp.eq.s32.totalorder %v229, %v83
  %vm314 = vcmp.eq.s32.totalorder %v232, %v83
  %vm315 = vcmp.eq.s32.totalorder %v235, %v83
  %vm316 = vcmp.eq.s32.totalorder %v238, %v83
  %vm317 = vcmp.eq.s32.totalorder %v241, %v83
  %vm318 = vcmp.eq.s32.totalorder %v244, %v83
  %vm319 = vcmp.eq.s32.totalorder %v247, %v83
  %vm320 = vcmp.eq.s32.totalorder %v250, %v83
  %vm321 = vcmp.eq.s32.totalorder %v253, %v83
  %vm322 = vcmp.eq.s32.totalorder %v256, %v83
  %vm323 = vcmp.eq.s32.totalorder %v259, %v83
  %vm324 = vcmp.eq.s32.totalorder %v262, %v83
  %vm325 = vcmp.eq.s32.totalorder %v265, %v83
  %vm326 = vcmp.eq.s32.totalorder %v268, %v83
  %vm327 = vcmp.eq.s32.totalorder %v271, %v83
  %vm328 = vcmp.eq.s32.totalorder %v274, %v83
  %vm329 = vcmp.eq.s32.totalorder %v277, %v83
  %vm330 = vcmp.eq.s32.totalorder %v280, %v83
  %vm331 = vcmp.eq.s32.totalorder %v283, %v83
  %vm332 = vcmp.eq.s32.totalorder %v286, %v83
  %vm333 = vcmp.eq.s32.totalorder %v289, %v83
  %vm334 = vcmp.eq.s32.totalorder %v292, %v83
  %vm335 = vcmp.eq.s32.totalorder %v295, %v83
  %vm336 = vcmp.eq.s32.totalorder %v298, %v83
  %vm337 = vcmp.eq.s32.totalorder %v301, %v83
  %vm338 = vcmp.eq.s32.totalorder %v304, %v83
  %vm339 = vcmp.eq.s32.totalorder %v307, %v83
  %vm340 = vmor %vm180, %vm308
  %vm341 = vmor %vm181, %vm309
  %vm342 = vmor %vm182, %vm310
  %vm343 = vmor %vm183, %vm311
  %vm344 = vmor %vm184, %vm312
  %vm345 = vmor %vm185, %vm313
  %vm346 = vmor %vm186, %vm314
  %vm347 = vmor %vm187, %vm315
  %vm348 = vmor %vm188, %vm316
  %vm349 = vmor %vm189, %vm317
  %vm350 = vmor %vm190, %vm318
  %vm351 = vmor %vm191, %vm319
  %vm352 = vmor %vm192, %vm320
  %vm353 = vmor %vm193, %vm321
  %vm354 = vmor %vm194, %vm322
  %vm355 = vmor %vm195, %vm323
  %vm356 = vmor %vm196, %vm324
  %vm357 = vmor %vm197, %vm325
  %vm358 = vmor %vm198, %vm326
  %vm359 = vmor %vm199, %vm327
  %vm360 = vmor %vm200, %vm328
  %vm361 = vmor %vm201, %vm329
  %vm362 = vmor %vm202, %vm330
  %vm363 = vmor %vm203, %vm331
  %vm364 = vmor %vm204, %vm332
  %vm365 = vmor %vm205, %vm333
  %vm366 = vmor %vm206, %vm334
  %vm367 = vmor %vm207, %vm335
  %vm368 = vmor %vm208, %vm336
  %vm369 = vmor %vm209, %vm337
  %vm370 = vmor %vm210, %vm338
  %vm371 = vmor %vm211, %vm339
  %372 = vset.pattern.permute.xlu0 2
  %373 = vperm.xlu0 %372, %v47
  %v374 = vpop.permute.xlu0 %373
  %375 = vset.pattern.permute.xlu0 2
  %376 = vperm.xlu0 %375, %v48
  %v377 = vpop.permute.xlu0 %376
  %378 = vset.pattern.permute.xlu0 2
  %379 = vperm.xlu0 %378, %v49
  %v380 = vpop.permute.xlu0 %379
  %381 = vset.pattern.permute.xlu0 2
  %382 = vperm.xlu0 %381, %v50
  %v383 = vpop.permute.xlu0 %382
  %384 = vset.pattern.permute.xlu0 2
  %385 = vperm.xlu0 %384, %v51
  %v386 = vpop.permute.xlu0 %385
  %387 = vset.pattern.permute.xlu0 2
  %388 = vperm.xlu0 %387, %v52
  %v389 = vpop.permute.xlu0 %388
  %390 = vset.pattern.permute.xlu0 2
  %391 = vperm.xlu0 %390, %v53
  %v392 = vpop.permute.xlu0 %391
  %393 = vset.pattern.permute.xlu0 2
  %394 = vperm.xlu0 %393, %v54
  %v395 = vpop.permute.xlu0 %394
  %396 = vset.pattern.permute.xlu0 2
  %397 = vperm.xlu0 %396, %v55
  %v398 = vpop.permute.xlu0 %397
  %399 = vset.pattern.permute.xlu0 2
  %400 = vperm.xlu0 %399, %v56
  %v401 = vpop.permute.xlu0 %400
  %402 = vset.pattern.permute.xlu0 2
  %403 = vperm.xlu0 %402, %v57
  %v404 = vpop.permute.xlu0 %403
  %405 = vset.pattern.permute.xlu0 2
  %406 = vperm.xlu0 %405, %v58
  %v407 = vpop.permute.xlu0 %406
  %408 = vset.pattern.permute.xlu0 2
  %409 = vperm.xlu0 %408, %v59
  %v410 = vpop.permute.xlu0 %409
  %411 = vset.pattern.permute.xlu0 2
  %412 = vperm.xlu0 %411, %v60
  %v413 = vpop.permute.xlu0 %412
  %414 = vset.pattern.permute.xlu0 2
  %415 = vperm.xlu0 %414, %v61
  %v416 = vpop.permute.xlu0 %415
  %417 = vset.pattern.permute.xlu0 2
  %418 = vperm.xlu0 %417, %v62
  %v419 = vpop.permute.xlu0 %418
  %420 = vset.pattern.permute.xlu0 2
  %421 = vperm.xlu0 %420, %v63
  %v422 = vpop.permute.xlu0 %421
  %423 = vset.pattern.permute.xlu0 2
  %424 = vperm.xlu0 %423, %v64
  %v425 = vpop.permute.xlu0 %424
  %426 = vset.pattern.permute.xlu0 2
  %427 = vperm.xlu0 %426, %v65
  %v428 = vpop.permute.xlu0 %427
  %429 = vset.pattern.permute.xlu0 2
  %430 = vperm.xlu0 %429, %v66
  %v431 = vpop.permute.xlu0 %430
  %432 = vset.pattern.permute.xlu0 2
  %433 = vperm.xlu0 %432, %v67
  %v434 = vpop.permute.xlu0 %433
  %435 = vset.pattern.permute.xlu0 2
  %436 = vperm.xlu0 %435, %v68
  %v437 = vpop.permute.xlu0 %436
  %438 = vset.pattern.permute.xlu0 2
  %439 = vperm.xlu0 %438, %v69
  %v440 = vpop.permute.xlu0 %439
  %441 = vset.pattern.permute.xlu0 2
  %442 = vperm.xlu0 %441, %v70
  %v443 = vpop.permute.xlu0 %442
  %444 = vset.pattern.permute.xlu0 2
  %445 = vperm.xlu0 %444, %v71
  %v446 = vpop.permute.xlu0 %445
  %447 = vset.pattern.permute.xlu0 2
  %448 = vperm.xlu0 %447, %v72
  %v449 = vpop.permute.xlu0 %448
  %450 = vset.pattern.permute.xlu0 2
  %451 = vperm.xlu0 %450, %v73
  %v452 = vpop.permute.xlu0 %451
  %453 = vset.pattern.permute.xlu0 2
  %454 = vperm.xlu0 %453, %v74
  %v455 = vpop.permute.xlu0 %454
  %456 = vset.pattern.permute.xlu0 2
  %457 = vperm.xlu0 %456, %v75
  %v458 = vpop.permute.xlu0 %457
  %459 = vset.pattern.permute.xlu0 2
  %460 = vperm.xlu0 %459, %v76
  %v461 = vpop.permute.xlu0 %460
  %462 = vset.pattern.permute.xlu0 2
  %463 = vperm.xlu0 %462, %v77
  %v464 = vpop.permute.xlu0 %463
  %465 = vset.pattern.permute.xlu0 2
  %466 = vperm.xlu0 %465, %v78
  %v467 = vpop.permute.xlu0 %466
  %vm468 = vcmp.eq.s32.totalorder %v374, %v83
  %vm469 = vcmp.eq.s32.totalorder %v377, %v83
  %vm470 = vcmp.eq.s32.totalorder %v380, %v83
  %vm471 = vcmp.eq.s32.totalorder %v383, %v83
  %vm472 = vcmp.eq.s32.totalorder %v386, %v83
  %vm473 = vcmp.eq.s32.totalorder %v389, %v83
  %vm474 = vcmp.eq.s32.totalorder %v392, %v83
  %vm475 = vcmp.eq.s32.totalorder %v395, %v83
  %vm476 = vcmp.eq.s32.totalorder %v398, %v83
  %vm477 = vcmp.eq.s32.totalorder %v401, %v83
  %vm478 = vcmp.eq.s32.totalorder %v404, %v83
  %vm479 = vcmp.eq.s32.totalorder %v407, %v83
  %vm480 = vcmp.eq.s32.totalorder %v410, %v83
  %vm481 = vcmp.eq.s32.totalorder %v413, %v83
  %vm482 = vcmp.eq.s32.totalorder %v416, %v83
  %vm483 = vcmp.eq.s32.totalorder %v419, %v83
  %vm484 = vcmp.eq.s32.totalorder %v422, %v83
  %vm485 = vcmp.eq.s32.totalorder %v425, %v83
  %vm486 = vcmp.eq.s32.totalorder %v428, %v83
  %vm487 = vcmp.eq.s32.totalorder %v431, %v83
  %vm488 = vcmp.eq.s32.totalorder %v434, %v83
  %vm489 = vcmp.eq.s32.totalorder %v437, %v83
  %vm490 = vcmp.eq.s32.totalorder %v440, %v83
  %vm491 = vcmp.eq.s32.totalorder %v443, %v83
  %vm492 = vcmp.eq.s32.totalorder %v446, %v83
  %vm493 = vcmp.eq.s32.totalorder %v449, %v83
  %vm494 = vcmp.eq.s32.totalorder %v452, %v83
  %vm495 = vcmp.eq.s32.totalorder %v455, %v83
  %vm496 = vcmp.eq.s32.totalorder %v458, %v83
  %vm497 = vcmp.eq.s32.totalorder %v461, %v83
  %vm498 = vcmp.eq.s32.totalorder %v464, %v83
  %vm499 = vcmp.eq.s32.totalorder %v467, %v83
  %vm500 = vmor %vm340, %vm468
  %vm501 = vmor %vm341, %vm469
  %vm502 = vmor %vm342, %vm470
  %vm503 = vmor %vm343, %vm471
  %vm504 = vmor %vm344, %vm472
  %vm505 = vmor %vm345, %vm473
  %vm506 = vmor %vm346, %vm474
  %vm507 = vmor %vm347, %vm475
  %vm508 = vmor %vm348, %vm476
  %vm509 = vmor %vm349, %vm477
  %vm510 = vmor %vm350, %vm478
  %vm511 = vmor %vm351, %vm479
  %vm512 = vmor %vm352, %vm480
  %vm513 = vmor %vm353, %vm481
  %vm514 = vmor %vm354, %vm482
  %vm515 = vmor %vm355, %vm483
  %vm516 = vmor %vm356, %vm484
  %vm517 = vmor %vm357, %vm485
  %vm518 = vmor %vm358, %vm486
  %vm519 = vmor %vm359, %vm487
  %vm520 = vmor %vm360, %vm488
  %vm521 = vmor %vm361, %vm489
  %vm522 = vmor %vm362, %vm490
  %vm523 = vmor %vm363, %vm491
  %vm524 = vmor %vm364, %vm492
  %vm525 = vmor %vm365, %vm493
  %vm526 = vmor %vm366, %vm494
  %vm527 = vmor %vm367, %vm495
  %vm528 = vmor %vm368, %vm496
  %vm529 = vmor %vm369, %vm497
  %vm530 = vmor %vm370, %vm498
  %vm531 = vmor %vm371, %vm499
  %v532 = vld [vmem:[#allocation2] sm:$0xff]
  %v533 = vld [vmem:[#allocation2 + $0x8] sm:$0xff]
  %v534 = vld [vmem:[#allocation2 + $0x10] sm:$0xff]
  %v535 = vld [vmem:[#allocation2 + $0x18] sm:$0xff]
  %v536 = vld [vmem:[#allocation2 + $0x20] sm:$0xff]
  %v537 = vld [vmem:[#allocation2 + $0x28] sm:$0xff]
  %v538 = vld [vmem:[#allocation2 + $0x30] sm:$0xff]
  %v539 = vld [vmem:[#allocation2 + $0x38] sm:$0xff]
  %v540 = vld [vmem:[#allocation2 + $0x40] sm:$0xff]
  %v541 = vld [vmem:[#allocation2 + $0x48] sm:$0xff]
  %v542 = vld [vmem:[#allocation2 + $0x50] sm:$0xff]
  %v543 = vld [vmem:[#allocation2 + $0x58] sm:$0xff]
  %v544 = vld [vmem:[#allocation2 + $0x60] sm:$0xff]
  %v545 = vld [vmem:[#allocation2 + $0x68] sm:$0xff]
  %v546 = vld [vmem:[#allocation2 + $0x70] sm:$0xff]
  %v547 = vld [vmem:[#allocation2 + $0x78] sm:$0xff]
  %v548 = vld [vmem:[#allocation2 + $0x80] sm:$0xff]
  %v549 = vld [vmem:[#allocation2 + $0x88] sm:$0xff]
  %v550 = vld [vmem:[#allocation2 + $0x90] sm:$0xff]
  %v551 = vld [vmem:[#allocation2 + $0x98] sm:$0xff]
  %v552 = vld [vmem:[#allocation2 + $0xa0] sm:$0xff]
  %v553 = vld [vmem:[#allocation2 + $0xa8] sm:$0xff]
  %v554 = vld [vmem:[#allocation2 + $0xb0] sm:$0xff]
  %v555 = vld [vmem:[#allocation2 + $0xb8] sm:$0xff]
  %v556 = vld [vmem:[#allocation2 + $0xc0] sm:$0xff]
  %v557 = vld [vmem:[#allocation2 + $0xc8] sm:$0xff]
  %v558 = vld [vmem:[#allocation2 + $0xd0] sm:$0xff]
  %v559 = vld [vmem:[#allocation2 + $0xd8] sm:$0xff]
  %v560 = vld [vmem:[#allocation2 + $0xe0] sm:$0xff]
  %v561 = vld [vmem:[#allocation2 + $0xe8] sm:$0xff]
  %v562 = vld [vmem:[#allocation2 + $0xf0] sm:$0xff]
  %v563 = vld [vmem:[#allocation2 + $0xf8] sm:$0xff]
  %v564 = vsel %vm500, 1, 0
  %v565 = vsel %vm501, 1, 0
  %v566 = vsel %vm502, 1, 0
  %v567 = vsel %vm503, 1, 0
  %v568 = vsel %vm504, 1, 0
  %v569 = vsel %vm505, 1, 0
  %v570 = vsel %vm506, 1, 0
  %v571 = vsel %vm507, 1, 0
  %v572 = vsel %vm508, 1, 0
  %v573 = vsel %vm509, 1, 0
  %v574 = vsel %vm510, 1, 0
  %v575 = vsel %vm511, 1, 0
  %v576 = vsel %vm512, 1, 0
  %v577 = vsel %vm513, 1, 0
  %v578 = vsel %vm514, 1, 0
  %v579 = vsel %vm515, 1, 0
  %v580 = vsel %vm516, 1, 0
  %v581 = vsel %vm517, 1, 0
  %v582 = vsel %vm518, 1, 0
  %v583 = vsel %vm519, 1, 0
  %v584 = vsel %vm520, 1, 0
  %v585 = vsel %vm521, 1, 0
  %v586 = vsel %vm522, 1, 0
  %v587 = vsel %vm523, 1, 0
  %v588 = vsel %vm524, 1, 0
  %v589 = vsel %vm525, 1, 0
  %v590 = vsel %vm526, 1, 0
  %v591 = vsel %vm527, 1, 0
  %v592 = vsel %vm528, 1, 0
  %v593 = vsel %vm529, 1, 0
  %v594 = vsel %vm530, 1, 0
  %v595 = vsel %vm531, 1, 0
  %v596 = vcvt.s32.f32 %v564
  %v597 = vcvt.s32.f32 %v565
  %v598 = vcvt.s32.f32 %v566
  %v599 = vcvt.s32.f32 %v567
  %v600 = vcvt.s32.f32 %v568
  %v601 = vcvt.s32.f32 %v569
  %v602 = vcvt.s32.f32 %v570
  %v603 = vcvt.s32.f32 %v571
  %v604 = vcvt.s32.f32 %v572
  %v605 = vcvt.s32.f32 %v573
  %v606 = vcvt.s32.f32 %v574
  %v607 = vcvt.s32.f32 %v575
  %v608 = vcvt.s32.f32 %v576
  %v609 = vcvt.s32.f32 %v577
  %v610 = vcvt.s32.f32 %v578
  %v611 = vcvt.s32.f32 %v579
  %v612 = vcvt.s32.f32 %v580
  %v613 = vcvt.s32.f32 %v581
  %v614 = vcvt.s32.f32 %v582
  %v615 = vcvt.s32.f32 %v583
  %v616 = vcvt.s32.f32 %v584
  %v617 = vcvt.s32.f32 %v585
  %v618 = vcvt.s32.f32 %v586
  %v619 = vcvt.s32.f32 %v587
  %v620 = vcvt.s32.f32 %v588
  %v621 = vcvt.s32.f32 %v589
  %v622 = vcvt.s32.f32 %v590
  %v623 = vcvt.s32.f32 %v591
  %v624 = vcvt.s32.f32 %v592
  %v625 = vcvt.s32.f32 %v593
  %v626 = vcvt.s32.f32 %v594
  %v627 = vcvt.s32.f32 %v595
  %v628 = vld [vmem:[%s1] sm:$0xff]
  %v629 = vld [vmem:[%s1 + $0x8] sm:$0xff]
  %v630 = vld [vmem:[%s1 + $0x10] sm:$0xff]
  %v631 = vld [vmem:[%s1 + $0x18] sm:$0xff]
  %v632 = vld [vmem:[%s1 + $0x20] sm:$0xff]
  %v633 = vld [vmem:[%s1 + $0x28] sm:$0xff]
  %v634 = vld [vmem:[%s1 + $0x30] sm:$0xff]
  %v635 = vld [vmem:[%s1 + $0x38] sm:$0xff]
  %v636 = vld [vmem:[%s1 + $0x40] sm:$0xff]
  %v637 = vld [vmem:[%s1 + $0x48] sm:$0xff]
  %v638 = vld [vmem:[%s1 + $0x50] sm:$0xff]
  %v639 = vld [vmem:[%s1 + $0x58] sm:$0xff]
  %v640 = vld [vmem:[%s1 + $0x60] sm:$0xff]
  %v641 = vld [vmem:[%s1 + $0x68] sm:$0xff]
  %v642 = vld [vmem:[%s1 + $0x70] sm:$0xff]
  %v643 = vld [vmem:[%s1 + $0x78] sm:$0xff]
  %644 = vmatprep.subr.mxu0 0.0
  %645 = vmatpush1.msra.mxu0 %v643
  %646 = vmatprep.subr.mxu0 0.0
  %647 = vmatpush1.msra.mxu0 %v642
  %648 = vmatprep.subr.mxu0 0.0
  %649 = vmatpush1.msra.mxu0 %v641
  %650 = vmatprep.subr.mxu0 0.0
  %651 = vmatpush1.msra.mxu0 %v640
  %652 = vmatprep.subr.mxu0 0.0
  %653 = vmatpush1.msra.mxu0 %v639
  %654 = vmatprep.subr.mxu0 0.0
  %655 = vmatpush1.msra.mxu0 %v638
  %656 = vmatprep.subr.mxu0 0.0
  %657 = vmatpush1.msra.mxu0 %v637
  %658 = vmatprep.subr.mxu0 0.0
  %659 = vmatpush1.msra.mxu0 %v636
  %660 = vmatprep.subr.mxu0 0.0
  %661 = vmatpush1.msra.mxu0 %v635
  %662 = vmatprep.subr.mxu0 0.0
  %663 = vmatpush1.msra.mxu0 %v634
  %664 = vmatprep.subr.mxu0 0.0
  %665 = vmatpush1.msra.mxu0 %v633
  %666 = vmatprep.subr.mxu0 0.0
  %667 = vmatpush1.msra.mxu0 %v632
  %668 = vmatprep.subr.mxu0 0.0
  %669 = vmatpush1.msra.mxu0 %v631
  %670 = vmatprep.subr.mxu0 0.0
  %671 = vmatpush1.msra.mxu0 %v630
  %672 = vmatprep.subr.mxu0 0.0
  %673 = vmatpush1.msra.mxu0 %v629
  %674 = vmatprep.subr.mxu0 0.0
  %675 = vmatpush1.msra.mxu0 %v628
  %676 = vmatprep.subr.mxu0 0.0
  %677 = vmatpush2.msra.mxu0 0.0
  %678 = vmatprep.subr.mxu0 0.0
  %679 = vmatpush2.msra.mxu0 0.0
  %680 = vmatprep.subr.mxu0 0.0
  %681 = vmatpush2.msra.mxu0 0.0
  %682 = vmatprep.subr.mxu0 0.0
  %683 = vmatpush2.msra.mxu0 0.0
  %684 = vmatprep.subr.mxu0 0.0
  %685 = vmatpush2.msra.mxu0 0.0
  %686 = vmatprep.subr.mxu0 0.0
  %687 = vmatpush2.msra.mxu0 0.0
  %688 = vmatprep.subr.mxu0 0.0
  %689 = vmatpush2.msra.mxu0 0.0
  %690 = vmatprep.subr.mxu0 0.0
  %691 = vmatpush2.msra.mxu0 0.0
  %692 = vmatprep.subr.mxu0 0.0
  %693 = vmatpush2.msra.mxu0 0.0
  %694 = vmatprep.subr.mxu0 0.0
  %695 = vmatpush2.msra.mxu0 0.0
  %696 = vmatprep.subr.mxu0 0.0
  %697 = vmatpush2.msra.mxu0 0.0
  %698 = vmatprep.subr.mxu0 0.0
  %699 = vmatpush2.msra.mxu0 0.0
  %700 = vmatprep.subr.mxu0 0.0
  %701 = vmatpush2.msra.mxu0 0.0
  %702 = vmatprep.subr.mxu0 0.0
  %703 = vmatpush2.msra.mxu0 0.0
  %704 = vmatprep.subr.mxu0 0.0
  %705 = vmatpush2.msra.mxu0 0.0
  %706 = vmatprep.subr.mxu0 0.0
  %707 = vmatpush2.msra.mxu0 0.0
  %708 = vmatprep.mubr.f32.mxu0 0.0
  %709 = vmatmul.mubr.f32.gmra.mxu0 %v596
  %v710 = vpop.f32.mrf.mxu0
  %v711 = vadd.f32 0.0, %v710
  %v712 = vpop.f32.mrf.mxu0
  %713 = vmatprep.mubr.f32.mxu0 0.0
  %714 = vmatmul.mubr.f32.gmra.mxu0 %v597
  %v715 = vpop.f32.mrf.mxu0
  %v716 = vadd.f32 0.0, %v715
  %v717 = vpop.f32.mrf.mxu0
  %718 = vmatprep.mubr.f32.mxu0 0.0
  %719 = vmatmul.mubr.f32.gmra.mxu0 %v598
  %v720 = vpop.f32.mrf.mxu0
  %v721 = vadd.f32 0.0, %v720
  %v722 = vpop.f32.mrf.mxu0
  %723 = vmatprep.mubr.f32.mxu0 0.0
  %724 = vmatmul.mubr.f32.gmra.mxu0 %v599
  %v725 = vpop.f32.mrf.mxu0
  %v726 = vadd.f32 0.0, %v725
  %v727 = vpop.f32.mrf.mxu0
  %728 = vmatprep.mubr.f32.mxu0 0.0
  %729 = vmatmul.mubr.f32.gmra.mxu0 %v600
  %v730 = vpop.f32.mrf.mxu0
  %v731 = vadd.f32 0.0, %v730
  %v732 = vpop.f32.mrf.mxu0
  %733 = vmatprep.mubr.f32.mxu0 0.0
  %734 = vmatmul.mubr.f32.gmra.mxu0 %v601
  %v735 = vpop.f32.mrf.mxu0
  %v736 = vadd.f32 0.0, %v735
  %v737 = vpop.f32.mrf.mxu0
  %738 = vmatprep.mubr.f32.mxu0 0.0
  %739 = vmatmul.mubr.f32.gmra.mxu0 %v602
  %v740 = vpop.f32.mrf.mxu0
  %v741 = vadd.f32 0.0, %v740
  %v742 = vpop.f32.mrf.mxu0
  %743 = vmatprep.mubr.f32.mxu0 0.0
  %744 = vmatmul.mubr.f32.gmra.mxu0 %v603
  %v745 = vpop.f32.mrf.mxu0
  %v746 = vadd.f32 0.0, %v745
  %v747 = vpop.f32.mrf.mxu0
  %748 = vmatprep.mubr.f32.mxu0 0.0
  %749 = vmatmul.mubr.f32.gmra.mxu0 %v604
  %v750 = vpop.f32.mrf.mxu0
  %v751 = vadd.f32 0.0, %v750
  %v752 = vpop.f32.mrf.mxu0
  %753 = vmatprep.mubr.f32.mxu0 0.0
  %754 = vmatmul.mubr.f32.gmra.mxu0 %v605
  %v755 = vpop.f32.mrf.mxu0
  %v756 = vadd.f32 0.0, %v755
  %v757 = vpop.f32.mrf.mxu0
  %758 = vmatprep.mubr.f32.mxu0 0.0
  %759 = vmatmul.mubr.f32.gmra.mxu0 %v606
  %v760 = vpop.f32.mrf.mxu0
  %v761 = vadd.f32 0.0, %v760
  %v762 = vpop.f32.mrf.mxu0
  %763 = vmatprep.mubr.f32.mxu0 0.0
  %764 = vmatmul.mubr.f32.gmra.mxu0 %v607
  %v765 = vpop.f32.mrf.mxu0
  %v766 = vadd.f32 0.0, %v765
  %v767 = vpop.f32.mrf.mxu0
  %768 = vmatprep.mubr.f32.mxu0 0.0
  %769 = vmatmul.mubr.f32.gmra.mxu0 %v608
  %v770 = vpop.f32.mrf.mxu0
  %v771 = vadd.f32 0.0, %v770
  %v772 = vpop.f32.mrf.mxu0
  %773 = vmatprep.mubr.f32.mxu0 0.0
  %774 = vmatmul.mubr.f32.gmra.mxu0 %v609
  %v775 = vpop.f32.mrf.mxu0
  %v776 = vadd.f32 0.0, %v775
  %v777 = vpop.f32.mrf.mxu0
  %778 = vmatprep.mubr.f32.mxu0 0.0
  %779 = vmatmul.mubr.f32.gmra.mxu0 %v610
  %v780 = vpop.f32.mrf.mxu0
  %v781 = vadd.f32 0.0, %v780
  %v782 = vpop.f32.mrf.mxu0
  %783 = vmatprep.mubr.f32.mxu0 0.0
  %784 = vmatmul.mubr.f32.gmra.mxu0 %v611
  %v785 = vpop.f32.mrf.mxu0
  %v786 = vadd.f32 0.0, %v785
  %v787 = vpop.f32.mrf.mxu0
  %788 = vmatprep.mubr.f32.mxu0 0.0
  %789 = vmatmul.mubr.f32.gmra.mxu0 %v612
  %v790 = vpop.f32.mrf.mxu0
  %v791 = vadd.f32 0.0, %v790
  %v792 = vpop.f32.mrf.mxu0
  %793 = vmatprep.mubr.f32.mxu0 0.0
  %794 = vmatmul.mubr.f32.gmra.mxu0 %v613
  %v795 = vpop.f32.mrf.mxu0
  %v796 = vadd.f32 0.0, %v795
  %v797 = vpop.f32.mrf.mxu0
  %798 = vmatprep.mubr.f32.mxu0 0.0
  %799 = vmatmul.mubr.f32.gmra.mxu0 %v614
  %v800 = vpop.f32.mrf.mxu0
  %v801 = vadd.f32 0.0, %v800
  %v802 = vpop.f32.mrf.mxu0
  %803 = vmatprep.mubr.f32.mxu0 0.0
  %804 = vmatmul.mubr.f32.gmra.mxu0 %v615
  %v805 = vpop.f32.mrf.mxu0
  %v806 = vadd.f32 0.0, %v805
  %v807 = vpop.f32.mrf.mxu0
  %808 = vmatprep.mubr.f32.mxu0 0.0
  %809 = vmatmul.mubr.f32.gmra.mxu0 %v616
  %v810 = vpop.f32.mrf.mxu0
  %v811 = vadd.f32 0.0, %v810
  %v812 = vpop.f32.mrf.mxu0
  %813 = vmatprep.mubr.f32.mxu0 0.0
  %814 = vmatmul.mubr.f32.gmra.mxu0 %v617
  %v815 = vpop.f32.mrf.mxu0
  %v816 = vadd.f32 0.0, %v815
  %v817 = vpop.f32.mrf.mxu0
  %818 = vmatprep.mubr.f32.mxu0 0.0
  %819 = vmatmul.mubr.f32.gmra.mxu0 %v618
  %v820 = vpop.f32.mrf.mxu0
  %v821 = vadd.f32 0.0, %v820
  %v822 = vpop.f32.mrf.mxu0
  %823 = vmatprep.mubr.f32.mxu0 0.0
  %824 = vmatmul.mubr.f32.gmra.mxu0 %v619
  %v825 = vpop.f32.mrf.mxu0
  %v826 = vadd.f32 0.0, %v825
  %v827 = vpop.f32.mrf.mxu0
  %828 = vmatprep.mubr.f32.mxu0 0.0
  %829 = vmatmul.mubr.f32.gmra.mxu0 %v620
  %v830 = vpop.f32.mrf.mxu0
  %v831 = vadd.f32 0.0, %v830
  %v832 = vpop.f32.mrf.mxu0
  %833 = vmatprep.mubr.f32.mxu0 0.0
  %834 = vmatmul.mubr.f32.gmra.mxu0 %v621
  %v835 = vpop.f32.mrf.mxu0
  %v836 = vadd.f32 0.0, %v835
  %v837 = vpop.f32.mrf.mxu0
  %838 = vmatprep.mubr.f32.mxu0 0.0
  %839 = vmatmul.mubr.f32.gmra.mxu0 %v622
  %v840 = vpop.f32.mrf.mxu0
  %v841 = vadd.f32 0.0, %v840
  %v842 = vpop.f32.mrf.mxu0
  %843 = vmatprep.mubr.f32.mxu0 0.0
  %844 = vmatmul.mubr.f32.gmra.mxu0 %v623
  %v845 = vpop.f32.mrf.mxu0
  %v846 = vadd.f32 0.0, %v845
  %v847 = vpop.f32.mrf.mxu0
  %848 = vmatprep.mubr.f32.mxu0 0.0
  %849 = vmatmul.mubr.f32.gmra.mxu0 %v624
  %v850 = vpop.f32.mrf.mxu0
  %v851 = vadd.f32 0.0, %v850
  %v852 = vpop.f32.mrf.mxu0
  %853 = vmatprep.mubr.f32.mxu0 0.0
  %854 = vmatmul.mubr.f32.gmra.mxu0 %v625
  %v855 = vpop.f32.mrf.mxu0
  %v856 = vadd.f32 0.0, %v855
  %v857 = vpop.f32.mrf.mxu0
  %858 = vmatprep.mubr.f32.mxu0 0.0
  %859 = vmatmul.mubr.f32.gmra.mxu0 %v626
  %v860 = vpop.f32.mrf.mxu0
  %v861 = vadd.f32 0.0, %v860
  %v862 = vpop.f32.mrf.mxu0
  %863 = vmatprep.mubr.f32.mxu0 0.0
  %864 = vmatmul.mubr.f32.gmra.mxu0 %v627
  %v865 = vpop.f32.mrf.mxu0
  %v866 = vadd.f32 0.0, %v865
  %v867 = vpop.f32.mrf.mxu0
  %868 = vdwg.mxu0
  %v869 = vadd.f32 %v532, %v711
  %v870 = vadd.f32 %v533, %v716
  %v871 = vadd.f32 %v534, %v721
  %v872 = vadd.f32 %v535, %v726
  %v873 = vadd.f32 %v536, %v731
  %v874 = vadd.f32 %v537, %v736
  %v875 = vadd.f32 %v538, %v741
  %v876 = vadd.f32 %v539, %v746
  %v877 = vadd.f32 %v540, %v751
  %v878 = vadd.f32 %v541, %v756
  %v879 = vadd.f32 %v542, %v761
  %v880 = vadd.f32 %v543, %v766
  %v881 = vadd.f32 %v544, %v771
  %v882 = vadd.f32 %v545, %v776
  %v883 = vadd.f32 %v546, %v781
  %v884 = vadd.f32 %v547, %v786
  %v885 = vadd.f32 %v548, %v791
  %v886 = vadd.f32 %v549, %v796
  %v887 = vadd.f32 %v550, %v801
  %v888 = vadd.f32 %v551, %v806
  %v889 = vadd.f32 %v552, %v811
  %v890 = vadd.f32 %v553, %v816
  %v891 = vadd.f32 %v554, %v821
  %v892 = vadd.f32 %v555, %v826
  %v893 = vadd.f32 %v556, %v831
  %v894 = vadd.f32 %v557, %v836
  %v895 = vadd.f32 %v558, %v841
  %v896 = vadd.f32 %v559, %v846
  %v897 = vadd.f32 %v560, %v851
  %v898 = vadd.f32 %v561, %v856
  %v899 = vadd.f32 %v562, %v861
  %v900 = vadd.f32 %v563, %v866
  %901 = vst [vmem:[#allocation2] sm:$0xff] %v869
  %902 = vst [vmem:[#allocation2 + $0x8] sm:$0xff] %v870
  %903 = vst [vmem:[#allocation2 + $0x10] sm:$0xff] %v871
  %904 = vst [vmem:[#allocation2 + $0x18] sm:$0xff] %v872
  %905 = vst [vmem:[#allocation2 + $0x20] sm:$0xff] %v873
  %906 = vst [vmem:[#allocation2 + $0x28] sm:$0xff] %v874
  %907 = vst [vmem:[#allocation2 + $0x30] sm:$0xff] %v875
  %908 = vst [vmem:[#allocation2 + $0x38] sm:$0xff] %v876
  %909 = vst [vmem:[#allocation2 + $0x40] sm:$0xff] %v877
  %910 = vst [vmem:[#allocation2 + $0x48] sm:$0xff] %v878
  %911 = vst [vmem:[#allocation2 + $0x50] sm:$0xff] %v879
  %912 = vst [vmem:[#allocation2 + $0x58] sm:$0xff] %v880
  %913 = vst [vmem:[#allocation2 + $0x60] sm:$0xff] %v881
  %914 = vst [vmem:[#allocation2 + $0x68] sm:$0xff] %v882
  %915 = vst [vmem:[#allocation2 + $0x70] sm:$0xff] %v883
  %916 = vst [vmem:[#allocation2 + $0x78] sm:$0xff] %v884
  %917 = vst [vmem:[#allocation2 + $0x80] sm:$0xff] %v885
  %918 = vst [vmem:[#allocation2 + $0x88] sm:$0xff] %v886
  %919 = vst [vmem:[#allocation2 + $0x90] sm:$0xff] %v887
  %920 = vst [vmem:[#allocation2 + $0x98] sm:$0xff] %v888
  %921 = vst [vmem:[#allocation2 + $0xa0] sm:$0xff] %v889
  %922 = vst [vmem:[#allocation2 + $0xa8] sm:$0xff] %v890
  %923 = vst [vmem:[#allocation2 + $0xb0] sm:$0xff] %v891
  %924 = vst [vmem:[#allocation2 + $0xb8] sm:$0xff] %v892
  %925 = vst [vmem:[#allocation2 + $0xc0] sm:$0xff] %v893
  %926 = vst [vmem:[#allocation2 + $0xc8] sm:$0xff] %v894
  %927 = vst [vmem:[#allocation2 + $0xd0] sm:$0xff] %v895
  %928 = vst [vmem:[#allocation2 + $0xd8] sm:$0xff] %v896
  %929 = vst [vmem:[#allocation2 + $0xe0] sm:$0xff] %v897
  %930 = vst [vmem:[#allocation2 + $0xe8] sm:$0xff] %v898
  %931 = vst [vmem:[#allocation2 + $0xf0] sm:$0xff] %v899
  %932 = vst [vmem:[#allocation2 + $0xf8] sm:$0xff] %v900
  // Predicated region
  $region14: #{_fused_lookup.1} parent=0 // pred_check
    %p933 = pneg %p11
  $region15: #{_fused_lookup.1} parent=0 // pred_check_branch
    %935 = sbr.rel (%p933) target = $region17
  $region16: #{_fused_lookup.1} parent=0 // pred_region
    %v936 = vld [vmem:[#allocation2] sm:$0xff]
    %v937 = vld [vmem:[#allocation2 + $0x8] sm:$0xff]
    %v938 = vld [vmem:[#allocation2 + $0x10] sm:$0xff]
    %v939 = vld [vmem:[#allocation2 + $0x18] sm:$0xff]
    %v940 = vld [vmem:[#allocation2 + $0x20] sm:$0xff]
    %v941 = vld [vmem:[#allocation2 + $0x28] sm:$0xff]
    %v942 = vld [vmem:[#allocation2 + $0x30] sm:$0xff]
    %v943 = vld [vmem:[#allocation2 + $0x38] sm:$0xff]
    %v944 = vld [vmem:[#allocation2 + $0x40] sm:$0xff]
    %v945 = vld [vmem:[#allocation2 + $0x48] sm:$0xff]
    %v946 = vld [vmem:[#allocation2 + $0x50] sm:$0xff]
    %v947 = vld [vmem:[#allocation2 + $0x58] sm:$0xff]
    %v948 = vld [vmem:[#allocation2 + $0x60] sm:$0xff]
    %v949 = vld [vmem:[#allocation2 + $0x68] sm:$0xff]
    %v950 = vld [vmem:[#allocation2 + $0x70] sm:$0xff]
    %v951 = vld [vmem:[#allocation2 + $0x78] sm:$0xff]
    %v952 = vld [vmem:[#allocation2 + $0x80] sm:$0xff]
    %v953 = vld [vmem:[#allocation2 + $0x88] sm:$0xff]
    %v954 = vld [vmem:[#allocation2 + $0x90] sm:$0xff]
    %v955 = vld [vmem:[#allocation2 + $0x98] sm:$0xff]
    %v956 = vld [vmem:[#allocation2 + $0xa0] sm:$0xff]
    %v957 = vld [vmem:[#allocation2 + $0xa8] sm:$0xff]
    %v958 = vld [vmem:[#allocation2 + $0xb0] sm:$0xff]
    %v959 = vld [vmem:[#allocation2 + $0xb8] sm:$0xff]
    %v960 = vld [vmem:[#allocation2 + $0xc0] sm:$0xff]
    %v961 = vld [vmem:[#allocation2 + $0xc8] sm:$0xff]
    %v962 = vld [vmem:[#allocation2 + $0xd0] sm:$0xff]
    %v963 = vld [vmem:[#allocation2 + $0xd8] sm:$0xff]
    %v964 = vld [vmem:[#allocation2 + $0xe0] sm:$0xff]
    %v965 = vld [vmem:[#allocation2 + $0xe8] sm:$0xff]
    %v966 = vld [vmem:[#allocation2 + $0xf0] sm:$0xff]
    %v967 = vld [vmem:[#allocation2 + $0xf8] sm:$0xff]
    %968 = vst [vmem:[%s2] sm:$0xff] %v936
    %969 = vst [vmem:[%s2 + $0x8] sm:$0xff] %v937
    %970 = vst [vmem:[%s2 + $0x10] sm:$0xff] %v938
    %971 = vst [vmem:[%s2 + $0x18] sm:$0xff] %v939
    %972 = vst [vmem:[%s2 + $0x20] sm:$0xff] %v940
    %973 = vst [vmem:[%s2 + $0x28] sm:$0xff] %v941
    %974 = vst [vmem:[%s2 + $0x30] sm:$0xff] %v942
    %975 = vst [vmem:[%s2 + $0x38] sm:$0xff] %v943
    %976 = vst [vmem:[%s2 + $0x40] sm:$0xff] %v944
    %977 = vst [vmem:[%s2 + $0x48] sm:$0xff] %v945
    %978 = vst [vmem:[%s2 + $0x50] sm:$0xff] %v946
    %979 = vst [vmem:[%s2 + $0x58] sm:$0xff] %v947
    %980 = vst [vmem:[%s2 + $0x60] sm:$0xff] %v948
    %981 = vst [vmem:[%s2 + $0x68] sm:$0xff] %v949
    %982 = vst [vmem:[%s2 + $0x70] sm:$0xff] %v950
    %983 = vst [vmem:[%s2 + $0x78] sm:$0xff] %v951
    %984 = vst [vmem:[%s2 + $0x80] sm:$0xff] %v952
    %985 = vst [vmem:[%s2 + $0x88] sm:$0xff] %v953
    %986 = vst [vmem:[%s2 + $0x90] sm:$0xff] %v954
    %987 = vst [vmem:[%s2 + $0x98] sm:$0xff] %v955
    %988 = vst [vmem:[%s2 + $0xa0] sm:$0xff] %v956
    %989 = vst [vmem:[%s2 + $0xa8] sm:$0xff] %v957
    %990 = vst [vmem:[%s2 + $0xb0] sm:$0xff] %v958
    %991 = vst [vmem:[%s2 + $0xb8] sm:$0xff] %v959
    %992 = vst [vmem:[%s2 + $0xc0] sm:$0xff] %v960
    %993 = vst [vmem:[%s2 + $0xc8] sm:$0xff] %v961
    %994 = vst [vmem:[%s2 + $0xd0] sm:$0xff] %v962
    %995 = vst [vmem:[%s2 + $0xd8] sm:$0xff] %v963
    %996 = vst [vmem:[%s2 + $0xe0] sm:$0xff] %v964
    %997 = vst [vmem:[%s2 + $0xe8] sm:$0xff] %v965
    %998 = vst [vmem:[%s2 + $0xf0] sm:$0xff] %v966
    %999 = vst [vmem:[%s2 + $0xf8] sm:$0xff] %v967
  $region17: #{_fused_lookup.1} parent=0 // pred_fallthru
    _
  // Predicated region
  $region18: #{_fused_lookup.1} parent=0 // pred_check
    _
  $region19: #{_fused_lookup.1} parent=0 // pred_check_branch
    %1001 = sbr.rel (0) target = $region21
  $region20: #{_fused_lookup.1} parent=0 // pred_region
    _
  $region21: #{_fused_lookup.1} parent=0 // pred_fallthru
    _
  // Predicated region
  $region22: #{_fused_lookup.1} parent=0 // pred_check
    _
  $region23: #{_fused_lookup.1} parent=0 // pred_check_branch
    %1003 = sbr.rel (0) target = $region25
  $region24: #{_fused_lookup.1} parent=0 // pred_region
    _
  $region25: #{_fused_lookup.1} parent=0 // pred_fallthru
    _

</llo_original>
